<compile_context>
chip_gen: v6e
topology: v6e:2x2x1
jax: 0.10.0
libtpu: 0.0.40
codegen_flags: <defaults>
</compile_context>

<pallas_src>
import functools

import jax
import jax.numpy as jnp
from jax.experimental import pallas as pl
from jax.experimental.pallas import tpu as pltpu

# ---- module hyper-parameters (small, consistent with the module) ----
BATCH = 8
INPUT_DIM = 32
OUTPUT_DIM = 32
DEGREE = 3          # degree+1 = 4 Chebyshev basis functions

LANE = 128          # TPU lane width; output padded to a multiple of this
BATCH_TILE_CAP = 256   # fills 256-wide MXU M on v6e/v7x, bounds vreg pressure


def _cheby_kan_kernel(x_ref, w_ref, o_ref, *, degree):
    """One (out_tile, batch_tile) grid step of ChebyKAN.

    x_ref: (TB, IN)               input tile
    w_ref: (IN*(degree+1), OT)    fused coefficient tile (K along rows)
    o_ref: (TB, OT)               output tile (lane-dense, OT % 128 == 0)
    """
    # Compute the basis in f32 regardless of the activation dtype (v5e's
    # VPU/EUP have no bf16 path).  |tanh(tanh(x))| <= tanh(1) ~ 0.762 < 1.
    t = jnp.tanh(jnp.tanh(x_ref[...].astype(jnp.float32)))       # (TB, IN)

    # Chebyshev recurrence: pure VPU mul/add, no acos/cos on the EUP.
    cheb = [jnp.ones_like(t)]                                     # T_0
    if degree >= 1:
        cheb.append(t)                                            # T_1
    for _ in range(2, degree + 1):
        cheb.append(2.0 * t * cheb[-1] - cheb[-2])                # T_{d+1}

    # Fused basis: column k = d*IN + i holds T_d(t_i), matching the w layout.
    # TODO(synk): for batch_tile >= 256 with large degree, stage T_d slices
    # into a (TB, K) VMEM scratch instead of a register concatenate.
    basis = jnp.concatenate(cheb, axis=-1)                        # (TB, K)

    # Single MXU matmul with f32 accumulation; basis is downcast to the
    # weight dtype (bf16 by default) only here, right at the MXU boundary.
    o_ref[...] = jnp.dot(
        basis.astype(w_ref.dtype), w_ref[...],
        preferred_element_type=jnp.float32,
    ).astype(o_ref.dtype)


def prepare_cheby_coeffs(cheby_coeffs, mxu_dtype=jnp.bfloat16):
    """One-time parameter prep (do this at init, NOT per forward call).

    (IN, OUT, D+1) PyTorch layout -> fused (IN*(D+1), OUT_pad) with row index
    k = d*IN + i and OUT zero-padded up to a multiple of 128 lanes.
    Default bf16 halves the weight HBM stream on every generation (the MXU is
    natively bf16 everywhere, accumulation stays f32).  Pass mxu_dtype=None to
    keep the original dtype.
    """
    in_dim, out_dim, dp1 = cheby_coeffs.shape
    w = jnp.transpose(cheby_coeffs, (2, 0, 1)).reshape(dp1 * in_dim, out_dim)
    out_pad = pl.cdiv(out_dim, LANE) * LANE
    if out_pad != out_dim:
        w = jnp.pad(w, ((0, 0), (0, out_pad - out_dim)))   # zero columns
    if mxu_dtype is not None:
        w = w.astype(mxu_dtype)
    return w


def cheby_kan_linear(x, w_fused, degree, out_dim, *,
                     batch_tile=None, out_tile=None, out_dtype=None,
                     slice_output=True):
    """x: (B, IN).  w_fused: output of prepare_cheby_coeffs, (IN*(D+1), OUT_pad)."""
    B, in_dim = x.shape
    K, out_pad = w_fused.shape
    assert K == in_dim * (degree + 1)
    assert out_pad % LANE == 0 and out_pad >= out_dim

    out_dtype = x.dtype if out_dtype is None else out_dtype
    x_bytes = jnp.dtype(x.dtype).itemsize
    w_bytes = jnp.dtype(w_fused.dtype).itemsize
    o_bytes = jnp.dtype(out_dtype).itemsize

    # ---- batch tiling: no forced splits on single-TC chips; cdiv padding
    # for awkward batch sizes instead of a tiny-tile perf cliff. ----
    if batch_tile is None:
        batch_tile = min(B, BATCH_TILE_CAP)
    B_pad = pl.cdiv(B, batch_tile) * batch_tile
    if B_pad != B:
        x = jnp.pad(x, ((0, B_pad - B), (0, 0)))

    # ---- OUT tiling: largest lane-dense tile whose double-buffered weight
    # slab fits a v7x-safe budget (also caps at 512 for sane residency). ----
    if out_tile is None:
        budget = 24 << 20                 # 2 * K * out_tile * w_bytes cap
        out_tile = out_pad
        for cand in (512, 256, 128):
            if out_pad % cand != 0:
                continue
            if out_tile > 512 or 2 * K * out_tile * w_bytes > budget:
                out_tile = cand
    assert out_pad % out_tile == 0

    # Grid = (out_tiles, batch_tiles): batch innermost so each w tile is
    # fetched from HBM exactly once and stays VMEM-resident across the
    # (cheap-to-refetch) x tiles.  Both axes are independent ("parallel");
    # on v7x the runtime can shard them across the two TensorCores.
    n_out_tiles = out_pad // out_tile
    n_batch_tiles = B_pad // batch_tile
    grid = (n_out_tiles, n_batch_tiles)

    # Explicit scoped-VMEM budget derived from double-buffered residency
    # (v7x default scoped limit is smaller than v5e/v6e).
    est = 2 * (batch_tile * in_dim * x_bytes
               + K * out_tile * w_bytes
               + batch_tile * out_tile * o_bytes) + (2 << 20)
    vmem_limit = int(min(max(est, 16 << 20), 48 << 20))

    cost = pl.CostEstimate(
        flops=2 * B_pad * K * out_pad
        + 3 * B_pad * in_dim * max(degree - 1, 0) * n_out_tiles,
        transcendentals=2 * B_pad * in_dim * n_out_tiles,
        bytes_accessed=(B_pad * in_dim * x_bytes * n_out_tiles
                        + K * out_pad * w_bytes
                        + B_pad * out_pad * o_bytes),
    )

    kernel = functools.partial(_cheby_kan_kernel, degree=degree)

    y_pad = pl.pallas_call(
        kernel,
        out_shape=jax.ShapeDtypeStruct((B_pad, out_pad), out_dtype),
        grid_spec=pltpu.PrefetchScalarGridSpec(
            num_scalar_prefetch=0,
            grid=grid,
            in_specs=[
                pl.BlockSpec((batch_tile, in_dim), lambda j, i: (i, 0)),
                pl.BlockSpec((K, out_tile), lambda j, i: (0, j)),
            ],
            out_specs=pl.BlockSpec((batch_tile, out_tile),
                                   lambda j, i: (i, j)),
        ),
        compiler_params=pltpu.CompilerParams(
            dimension_semantics=("parallel", "parallel"),
            vmem_limit_bytes=vmem_limit),
        cost_estimate=cost,
    )(x, w_fused)

    y = y_pad
    if B_pad != B:
        y = y[:B]
    if slice_output and out_pad != out_dim:
        # TODO(synk): when fusing several KAN layers, keep the zero-padded
        # lane-dense output flowing to the next layer and slice once at the
        # end of the network instead of paying this extra HBM round-trip.
        y = y[:, :out_dim]
    return y


def cheby_kan_reference(x, cheby_coeffs):
    """Pure-JAX reference mirroring the PyTorch forward exactly."""
    b, c_in = x.shape
    degree = cheby_coeffs.shape[-1] - 1
    xe = jnp.broadcast_to(x[:, :, None], (b, c_in, degree + 1))
    xe = jnp.tanh(xe)
    xe = jnp.tanh(xe)
    xe = jnp.arccos(xe)
    xe = xe * jnp.arange(0, degree + 1, dtype=x.dtype)
    xe = jnp.cos(xe)
    y = jnp.einsum('bid,iod->bo', xe, cheby_coeffs)
    return y.reshape(-1, cheby_coeffs.shape[1])


if __name__ == "__main__":
    key = jax.random.PRNGKey(0)
    k_x, k_w = jax.random.split(key)

    x = jax.random.normal(k_x, (BATCH, INPUT_DIM), dtype=jnp.float32)

    # nn.init.normal_(std = 1/(input_dim*(degree+1))), deterministic via PRNGKey(0)
    std = 1.0 / (INPUT_DIM * (DEGREE + 1))
    cheby_coeffs = std * jax.random.normal(
        k_w, (INPUT_DIM, OUTPUT_DIM, DEGREE + 1), dtype=jnp.float32)

    y_ref = cheby_kan_reference(x, cheby_coeffs)

    # --- check 1: f32 weights, tight tolerance (exact-math path) ---
    w_f32 = prepare_cheby_coeffs(cheby_coeffs, mxu_dtype=None)
    y_f32 = jax.block_until_ready(
        cheby_kan_linear(x, w_f32, DEGREE, OUTPUT_DIM))
    assert y_f32.shape == (BATCH, OUTPUT_DIM)
    assert jnp.allclose(y_f32, y_ref, atol=1e-5, rtol=1e-5), \
        "f32 kernel mismatch vs reference"

    # --- check 2: default bf16 weights, dtype-aware tolerance ---
    w_bf16 = prepare_cheby_coeffs(cheby_coeffs)      # bf16 by default
    y_bf16 = jax.block_until_ready(
        cheby_kan_linear(x, w_bf16, DEGREE, OUTPUT_DIM))
    assert y_bf16.shape == (BATCH, OUTPUT_DIM)
    assert jnp.allclose(y_bf16, y_ref, atol=1e-2, rtol=5e-2), \
        "bf16 kernel mismatch vs reference (beyond quantization tolerance)"

    print("KERNEL_OK")
</pallas_src>

<mosaic_0001>
module attributes {stable_mosaic.version = 11 : i64} {
  func.func @_cheby_kan_kernel(%arg0: i32, %arg1: i32, %arg2: memref<8x32xf32, #tpu.memory_space<vmem>>, %arg3: memref<128x128xf32, #tpu.memory_space<vmem>>, %arg4: memref<8x128xf32, #tpu.memory_space<vmem>>) attributes {dimension_semantics = [#tpu.dimension_semantics<parallel>, #tpu.dimension_semantics<parallel>], iteration_bounds = array<i64: 1, 1>, scalar_prefetch = 0 : i64, scratch_operands = 0 : i64, tpu.core_type = #tpu.core_type<tc>, window_params = [{transform_indices = @transform_0, window_bounds = array<i64: 8, 32>}, {transform_indices = @transform_1, window_bounds = array<i64: 128, 128>}, {transform_indices = @transform_2, window_bounds = array<i64: 8, 128>}]} {
    %c0 = arith.constant 0 : index
    %c0_0 = arith.constant 0 : index
    %0 = vector.load %arg2[%c0, %c0_0] : memref<8x32xf32, #tpu.memory_space<vmem>>, vector<8x32xf32>
    %1 = math.tanh %0 : vector<8x32xf32>
    %2 = math.tanh %1 : vector<8x32xf32>
    %cst = arith.constant 1.000000e+00 : f32
    %3 = vector.broadcast %cst : f32 to vector<8x32xf32>
    %cst_1 = arith.constant 2.000000e+00 : f32
    %4 = vector.broadcast %cst_1 : f32 to vector<8x32xf32>
    %5 = arith.mulf %4, %2 : vector<8x32xf32>
    %6 = arith.mulf %5, %2 : vector<8x32xf32>
    %7 = arith.subf %6, %3 : vector<8x32xf32>
    %cst_2 = arith.constant 2.000000e+00 : f32
    %8 = vector.broadcast %cst_2 : f32 to vector<8x32xf32>
    %9 = arith.mulf %8, %2 : vector<8x32xf32>
    %10 = arith.mulf %9, %7 : vector<8x32xf32>
    %11 = arith.subf %10, %2 : vector<8x32xf32>
    %12 = tpu.concatenate %3, %2, %7, %11 in 1 : vector<8x32xf32>, vector<8x32xf32>, vector<8x32xf32>, vector<8x32xf32> -> vector<8x128xf32>
    %c0_3 = arith.constant 0 : index
    %c0_4 = arith.constant 0 : index
    %13 = vector.load %arg3[%c0_3, %c0_4] : memref<128x128xf32, #tpu.memory_space<vmem>>, vector<128x128xf32>
    %cst_5 = arith.constant dense<0.000000e+00> : vector<8x128xf32>
    %14 = tpu.matmul %12, %13, %cst_5 {dimension_numbers = #tpu.dot_dimension_numbers<[1], [0], [0], [1], [0, 0, 1, 1], [], []>} : vector<8x128xf32>, vector<128x128xf32>, vector<8x128xf32> -> vector<8x128xf32>
    %c0_6 = arith.constant 0 : index
    %c0_7 = arith.constant 0 : index
    %15 = vector.load %arg4[%c0_6, %c0_7] : memref<8x128xf32, #tpu.memory_space<vmem>>, vector<8x128xf32>
    tpu.vector_store %arg4[%c0_6, %c0_7], %14 {strides = array<i32>} : memref<8x128xf32, #tpu.memory_space<vmem>>, vector<8x128xf32>,
    return
  }
  func.func @transform_0(%arg0: i32, %arg1: i32) -> (i32, i32) {
    %c0_i32 = arith.constant 0 : i32
    %c0_i32_0 = arith.constant 0 : i32
    return %arg1, %c0_i32 : i32, i32
  }
  func.func @transform_1(%arg0: i32, %arg1: i32) -> (i32, i32) {
    %c0_i32 = arith.constant 0 : i32
    %c0_i32_0 = arith.constant 0 : i32
    return %c0_i32, %arg0 : i32, i32
  }
  func.func @transform_2(%arg0: i32, %arg1: i32) -> (i32, i32) {
    %c0_i32 = arith.constant 0 : i32
    return %arg1, %arg0 : i32, i32
  }
}

</mosaic_0001>

<llo_original>
// kernel: tpu_custom_call.1
$region0: #{tpu_custom_call.1}
  #allocation0 [shape = 'u32[]', space=smem, size = 0x4, offset = 0x4, fixed_abs, tag = 'smem constant byte address 0x4 - core index']
  #allocation1 [shape = 'u32[144,128]{1,0:T(1,128)}', space=vmem, size = 0x12000, scoped, tag = 'internal scratch']
  %s0 = inlined_call_operand.hbm [shape: f32[8,32], index: 0, kind: input, shape index: {}]
  %s1 = inlined_call_operand.hbm [shape: f32[128,128], index: 1, kind: input, shape index: {}]
  %s2 = inlined_call_operand.hbm [shape: f32[8,128], index: 2, kind: output, shape index: {}]
  %s3 = sld [smem:[#allocation0]]
  $region26: #{tpu_custom_call.1} parent=0
    _
  %s5 = ssub.s32 1, %s3
  %s6 = scalar_select 0, %s5, %s3
  $region1: #{tpu_custom_call.1} parent=0
    #allocation2 [shape = 'u8[4096]{0}', space=vmem, size = 0x1000, scoped, tag = 'input window, operand 0, single buffered']
    #allocation3 [shape = 's32[1]{0}', space=sflag, size = 0x4, scoped, tag = 'scoped memory for tpu_custom_call.1']
    #allocation4 [shape = 's32[1]{0}', space=sflag, size = 0x4, scoped, tag = 'scoped memory for tpu_custom_call.1']
    #allocation5 [shape = 'u8[65536]{0}', space=vmem, size = 0x10000, scoped, tag = 'input window, operand 1, single buffered']
    #allocation6 [shape = 's32[1]{0}', space=sflag, size = 0x4, scoped, tag = 'scoped memory for tpu_custom_call.1']
    #allocation7 [shape = 'u8[4096]{0}', space=vmem, size = 0x1000, scoped, tag = 'output window, operand 0, single buffered']
    %7 = vsyncpa [#allocation3], 0
    %8 = vsyncpa [#allocation6], 0
    %9 = vsyncpa [#allocation4], 0
    // Predicated region
    $region2: #{tpu_custom_call.1} parent=1 // pred_check
      _
    $region3: #{tpu_custom_call.1} parent=1 // pred_check_branch
      %11 = sbr.rel (0) target = $region5
    $region4: #{tpu_custom_call.1} parent=1 // pred_region
      %s13 = ssub.s32 128, 128
      %14 = vsyncadd [#allocation3], %s13
      %s16 = sshll.u32 [#allocation2], 4
      %s17 = int_to_ptr.vmem [resolvable:$true] %s16
      %19 = dma.hbm_to_vmem [thread:$0]  %s0, 128, %s17, [#allocation3]
    $region5: #{tpu_custom_call.1} parent=1 // pred_fallthru
      _
    // Predicated region
    $region6: #{tpu_custom_call.1} parent=1 // pred_check
      _
    $region7: #{tpu_custom_call.1} parent=1 // pred_check_branch
      %21 = sbr.rel (0) target = $region9
    $region8: #{tpu_custom_call.1} parent=1 // pred_region
      %s23 = ssub.s32 2048, 2048
      %24 = vsyncadd [#allocation6], %s23
      %s25 = sshll.u32 [#allocation5], 4
      %s26 = int_to_ptr.vmem [resolvable:$true] %s25
      %31 = dma.hbm_to_vmem [thread:$0]  %s1, 2048, %s26, [#allocation6], 128, 128, 8
    $region9: #{tpu_custom_call.1} parent=1 // pred_fallthru
      _
    // Predicated region
    $region10: #{tpu_custom_call.1} parent=1 // pred_check
      _
    $region11: #{tpu_custom_call.1} parent=1 // pred_check_branch
      %33 = sbr.rel (0) target = $region13
    $region12: #{tpu_custom_call.1} parent=1 // pred_region
      %34 = dma.done [#allocation3], 128
    $region13: #{tpu_custom_call.1} parent=1 // pred_fallthru
      _
    // Predicated region
    $region14: #{tpu_custom_call.1} parent=1 // pred_check
      _
    $region15: #{tpu_custom_call.1} parent=1 // pred_check_branch
      %36 = sbr.rel (0) target = $region17
    $region16: #{tpu_custom_call.1} parent=1 // pred_region
      %37 = dma.done [#allocation6], 2048
    $region17: #{tpu_custom_call.1} parent=1 // pred_fallthru
      _
    %v38 = vld [vmem:[#allocation2] sm:$0xff]
    %v39 = vtanh.pop %v38
    %v40 = vtanh.pop %v39
    %v41 = vmul.f32 %v40, 2.0
    %v42 = vmul.f32 %v41, %v40
    %v43 = vsub.f32 %v42, 1.0
    %v44 = vmul.f32 %v41, %v43
    %v45 = vsub.f32 %v44, %v40
    %47 = vrot.lane.b32.xlu0 %v40, 32
    %v48 = vpop.permute.xlu0 %47
    %51 = vrot.lane.b32.xlu0 %v43, 64
    %v52 = vpop.permute.xlu0 %51
    %55 = vrot.lane.b32.xlu0 %v45, 96
    %v56 = vpop.permute.xlu0 %55
    %vm58 = vcmask 261120
    %v59 = vsel %vm58, 1.0, %v48
    %vm60 = vcmask 523264
    %v61 = vsel %vm60, %v59, %v52
    %vm62 = vcmask 785408
    %v63 = vsel %vm62, %v61, %v56
    %v64 = vld [vmem:[#allocation5] sm:$0xff]
    %v65 = vld [vmem:[#allocation5 + $0x8] sm:$0xff]
    %v66 = vld [vmem:[#allocation5 + $0x10] sm:$0xff]
    %v67 = vld [vmem:[#allocation5 + $0x18] sm:$0xff]
    %v68 = vld [vmem:[#allocation5 + $0x20] sm:$0xff]
    %v69 = vld [vmem:[#allocation5 + $0x28] sm:$0xff]
    %v70 = vld [vmem:[#allocation5 + $0x30] sm:$0xff]
    %v71 = vld [vmem:[#allocation5 + $0x38] sm:$0xff]
    %v72 = vld [vmem:[#allocation5 + $0x40] sm:$0xff]
    %v73 = vld [vmem:[#allocation5 + $0x48] sm:$0xff]
    %v74 = vld [vmem:[#allocation5 + $0x50] sm:$0xff]
    %v75 = vld [vmem:[#allocation5 + $0x58] sm:$0xff]
    %v76 = vld [vmem:[#allocation5 + $0x60] sm:$0xff]
    %v77 = vld [vmem:[#allocation5 + $0x68] sm:$0xff]
    %v78 = vld [vmem:[#allocation5 + $0x70] sm:$0xff]
    %v79 = vld [vmem:[#allocation5 + $0x78] sm:$0xff]
    %80 = vmatprep.subr.mxu0 0.0
    %81 = vmatpush1.msra.mxu0 %v79
    %82 = vmatprep.subr.mxu0 0.0
    %83 = vmatpush1.msra.mxu0 %v78
    %84 = vmatprep.subr.mxu0 0.0
    %85 = vmatpush1.msra.mxu0 %v77
    %86 = vmatprep.subr.mxu0 0.0
    %87 = vmatpush1.msra.mxu0 %v76
    %88 = vmatprep.subr.mxu0 0.0
    %89 = vmatpush1.msra.mxu0 %v75
    %90 = vmatprep.subr.mxu0 0.0
    %91 = vmatpush1.msra.mxu0 %v74
    %92 = vmatprep.subr.mxu0 0.0
    %93 = vmatpush1.msra.mxu0 %v73
    %94 = vmatprep.subr.mxu0 0.0
    %95 = vmatpush1.msra.mxu0 %v72
    %96 = vmatprep.subr.mxu0 0.0
    %97 = vmatpush1.msra.mxu0 %v71
    %98 = vmatprep.subr.mxu0 0.0
    %99 = vmatpush1.msra.mxu0 %v70
    %100 = vmatprep.subr.mxu0 0.0
    %101 = vmatpush1.msra.mxu0 %v69
    %102 = vmatprep.subr.mxu0 0.0
    %103 = vmatpush1.msra.mxu0 %v68
    %104 = vmatprep.subr.mxu0 0.0
    %105 = vmatpush1.msra.mxu0 %v67
    %106 = vmatprep.subr.mxu0 0.0
    %107 = vmatpush1.msra.mxu0 %v66
    %108 = vmatprep.subr.mxu0 0.0
    %109 = vmatpush1.msra.mxu0 %v65
    %110 = vmatprep.subr.mxu0 0.0
    %111 = vmatpush1.msra.mxu0 %v64
    %112 = vmatprep.subr.mxu0 0.0
    %113 = vmatpush2.msra.mxu0 0.0
    %114 = vmatprep.subr.mxu0 0.0
    %115 = vmatpush2.msra.mxu0 0.0
    %116 = vmatprep.subr.mxu0 0.0
    %117 = vmatpush2.msra.mxu0 0.0
    %118 = vmatprep.subr.mxu0 0.0
    %119 = vmatpush2.msra.mxu0 0.0
    %120 = vmatprep.subr.mxu0 0.0
    %121 = vmatpush2.msra.mxu0 0.0
    %122 = vmatprep.subr.mxu0 0.0
    %123 = vmatpush2.msra.mxu0 0.0
    %124 = vmatprep.subr.mxu0 0.0
    %125 = vmatpush2.msra.mxu0 0.0
    %126 = vmatprep.subr.mxu0 0.0
    %127 = vmatpush2.msra.mxu0 0.0
    %128 = vmatprep.subr.mxu0 0.0
    %129 = vmatpush2.msra.mxu0 0.0
    %130 = vmatprep.subr.mxu0 0.0
    %131 = vmatpush2.msra.mxu0 0.0
    %132 = vmatprep.subr.mxu0 0.0
    %133 = vmatpush2.msra.mxu0 0.0
    %134 = vmatprep.subr.mxu0 0.0
    %135 = vmatpush2.msra.mxu0 0.0
    %136 = vmatprep.subr.mxu0 0.0
    %137 = vmatpush2.msra.mxu0 0.0
    %138 = vmatprep.subr.mxu0 0.0
    %139 = vmatpush2.msra.mxu0 0.0
    %140 = vmatprep.subr.mxu0 0.0
    %141 = vmatpush2.msra.mxu0 0.0
    %142 = vmatprep.subr.mxu0 0.0
    %143 = vmatpush2.msra.mxu0 0.0
    %144 = vmatprep.mubr.f32.mxu0 0.0
    %145 = vmatmul.mubr.f32.gmra.mxu0 %v63
    %v146 = vpop.f32.mrf.mxu0
    %v147 = vadd.f32 0.0, %v146
    %v148 = vpop.f32.mrf.mxu0
    %149 = vdwg.mxu0
    %150 = vst [vmem:[#allocation7] sm:$0xff] %v147
    // Predicated region
    $region18: #{tpu_custom_call.1} parent=1 // pred_check
      _
    $region19: #{tpu_custom_call.1} parent=1 // pred_check_branch
      %152 = sbr.rel (0) target = $region21
    $region20: #{tpu_custom_call.1} parent=1 // pred_region
      %s154 = ssub.s32 128, 128
      %155 = vsyncadd [#allocation4], %s154
      %s157 = sshll.u32 [#allocation7], 4
      %s158 = int_to_ptr.vmem [resolvable:$true] %s157
      %160 = dma.vmem_to_hbm [thread:$0]  %s158, 128, %s2, [#allocation4]
    $region21: #{tpu_custom_call.1} parent=1 // pred_fallthru
      _
    // Predicated region
    $region22: #{tpu_custom_call.1} parent=1 // pred_check
      _
    $region23: #{tpu_custom_call.1} parent=1 // pred_check_branch
      %162 = sbr.rel (0) target = $region25
    $region24: #{tpu_custom_call.1} parent=1 // pred_region
      %163 = dma.done [#allocation4], 128
    $region25: #{tpu_custom_call.1} parent=1 // pred_fallthru
      _
    %164 = vsyncpa [#allocation3], 1
    %165 = vsyncpa [#allocation6], 1
    %166 = vsyncpa [#allocation4], 1

</llo_original>
